<compile_context>
chip_gen: v5e
topology: v5e:2x2
jax: 0.10.0
libtpu: 0.0.40
codegen_flags: <defaults>
</compile_context>

<pallas_src>
import functools

import jax
import jax.numpy as jnp
from jax import lax
from jax.experimental import pallas as pl
from jax.experimental.pallas import tpu as pltpu


def _round_up(x, m):
    return (x + m - 1) // m * m


def _vmem_limits():
    """Returns (tile_budget_bytes, vmem_limit_bytes), v7x-safe by default."""
    phys = 64 * 1024 * 1024                      # v7x per-TC physical VMEM (smallest gen)
    try:
        cap = getattr(pltpu.get_tpu_info(), "vmem_capacity_bytes", None)
        if cap:
            phys = int(cap)                      # 128 MiB on v5e/v6e
    except Exception:
        pass
    vmem_limit = min(phys * 3 // 4, 112 * 1024 * 1024)   # ~48 MiB v7x / ~96 MiB v5e,v6e
    tile_budget = int(phys * 0.55)                        # what our buffers target
    return tile_budget, vmem_limit


def _triplet_kernel(xx_col_ref, xx_row_ref, lab_col_ref, lab_row_ref,
                    rows_ref, colsT_ref, out_ref, gram_ref,
                    *, margin, n_valid, tile_n):
    i = pl.program_id(0)        # anchor-row block   ("parallel")
    k = pl.program_id(1)        # feature-dim block  ("arbitrary", innermost)

    @pl.when(k == 0)
    def _init():
        gram_ref[...] = jnp.zeros_like(gram_ref)

    # Gram accumulation on the MXU: plain NN contraction (columns pre-transposed in
    # the wrapper, so no in-kernel transpose), native-dtype operands, f32 accumulate.
    gram_ref[...] += jnp.dot(rows_ref[...], colsT_ref[...],
                             preferred_element_type=jnp.float32)

    # ---- finalize: batch-hard mining + ranking loss (runs once per row block) ----
    @pl.when(k == pl.num_programs(1) - 1)
    def _finalize():
        xx_col = xx_col_ref[...]                                   # (tile_n, 1) f32
        xx_row = xx_row_ref[...]                                   # (1, n_pad) f32

        # Squared distance minus the per-row constant ||x_i||^2 (added back after the
        # row reductions); sqrt is deferred to the reduced (tile_n, 1) vectors.
        part = xx_row - 2.0 * gram_ref[...]                        # (tile_n, n_pad)

        sim = lab_col_ref[...] == lab_row_ref[...]                 # bool (tile_n, n_pad)
        col_valid = lax.broadcasted_iota(jnp.int32, lab_row_ref.shape, 1) < n_valid
        pos_mask = jnp.logical_and(sim, col_valid)
        neg_mask = jnp.logical_and(jnp.logical_not(sim), col_valid)

        hard_p_sq = jnp.max(jnp.where(pos_mask, part, -jnp.inf),
                            axis=1, keepdims=True) + xx_col
        hard_n_sq = jnp.min(jnp.where(neg_mask, part, jnp.inf),
                            axis=1, keepdims=True) + xx_col

        dist_ap = jnp.sqrt(jnp.maximum(hard_p_sq, 1e-12))          # (tile_n, 1)
        dist_an = jnp.sqrt(jnp.maximum(hard_n_sq, 1e-12))

        if margin is not None:
            # MarginRankingLoss(dist_an, dist_ap, y=1) = mean(relu(dist_ap - dist_an + m))
            per_row = jnp.maximum(dist_ap - dist_an + margin, 0.0)
        else:
            # SoftMarginLoss(dist_an - dist_ap, y=1) = softplus(dist_ap - dist_an), stable.
            z = dist_ap - dist_an
            per_row = jnp.maximum(z, 0.0) + jnp.log1p(jnp.exp(-jnp.abs(z)))

        # Zero out padded rows, reduce to one partial sum per row block, and store it
        # in a lane-dense (1, 8, 128) slab (no masked partial stores).
        row_ids = lax.broadcasted_iota(jnp.int32, per_row.shape, 0) + i * tile_n
        block_sum = jnp.sum(jnp.where(row_ids < n_valid, per_row, 0.0))
        out_ref[...] = jnp.full(out_ref.shape, block_sum, jnp.float32)


def triplet_loss(global_feat, labels, margin=None):
    """Batch-hard triplet loss. global_feat: (N, D); labels: (N,). Returns scalar f32."""
    N, D = global_feat.shape
    n_pad = _round_up(N, 128)                  # lane-dense (tile_n, n_pad) intermediates
    d_pad = _round_up(D, 128)
    itemsize = jnp.dtype(global_feat.dtype).itemsize

    tile_budget, vmem_limit = _vmem_limits()

    # ---- anchor-row tile: aim for 256-512 rows (high flop/B); keep the f32 epilogue
    #      (gram scratch + ~4 (tile_n, n_pad) temporaries) within half the budget. ----
    def epi_bytes(tn):
        return 5 * tn * n_pad * 4

    tile_n = 8
    for cand in (512, 256, 128, 64, 32, 16, 8):
        if n_pad % cand == 0 and epi_bytes(cand) <= tile_budget // 2:
            tile_n = cand
            break
    # Guarantee >= 2 row blocks so both v7x TensorCores get work (near-free elsewhere).
    if n_pad // tile_n < 2 and tile_n >= 16:
        tile_n //= 2

    # ---- feature tile: largest multiple-of-128 divisor of d_pad fitting the remaining
    #      budget (no zero-padding waste). If the whole matrix fits -> d_blocks == 1 and
    #      the column operand is resident (constant index_map => DMA'd exactly once). ----
    feat_budget = max(tile_budget - epi_bytes(tile_n),
                      2 * 128 * (n_pad + tile_n) * itemsize)
    d_units = d_pad // 128
    tile_d = 128
    for m in range(d_units, 0, -1):
        if d_units % m:
            continue
        td = m * 128
        if 2 * td * (n_pad + tile_n) * itemsize <= feat_budget:   # double-buffered cols+rows
            tile_d = td
            break

    row_blocks = n_pad // tile_n
    d_blocks = d_pad // tile_d

    # ---- layout plumbing (one-time XLA ops outside the kernel) ----
    feat_p = jnp.pad(global_feat, ((0, n_pad - N), (0, d_pad - D)))     # native dtype
    feat_T = feat_p.T                                                   # (d_pad, n_pad)

    xx = jnp.sum(jnp.square(global_feat.astype(jnp.float32)), axis=1)
    xx_p = jnp.pad(xx, (0, n_pad - N))
    lab_p = jnp.pad(labels.astype(jnp.int32), (0, n_pad - N))

    kernel = functools.partial(_triplet_kernel, margin=margin, n_valid=N,
                               tile_n=tile_n)

    block_sums = pl.pallas_call(
        kernel,
        out_shape=jax.ShapeDtypeStruct((row_blocks, 8, 128), jnp.float32),
        grid=(row_blocks, d_blocks),
        in_specs=[
            pl.BlockSpec((tile_n, 1), lambda i, k: (i, 0)),        # ||x||^2 column
            pl.BlockSpec((1, n_pad), lambda i, k: (0, 0)),         # ||x||^2 row
            pl.BlockSpec((tile_n, 1), lambda i, k: (i, 0)),        # labels column
            pl.BlockSpec((1, n_pad), lambda i, k: (0, 0)),         # labels row
            pl.BlockSpec((tile_n, tile_d), lambda i, k: (i, k)),   # anchor rows
            pl.BlockSpec((tile_d, n_pad), lambda i, k: (k, 0)),    # all columns (pre-T)
        ],
        out_specs=pl.BlockSpec((1, 8, 128), lambda i, k: (i, 0, 0)),
        scratch_shapes=[pltpu.VMEM((tile_n, n_pad), jnp.float32)],
        compiler_params=pltpu.CompilerParams(
            dimension_semantics=("parallel", "arbitrary"),
            vmem_limit_bytes=vmem_limit),
    )(xx_p.reshape(n_pad, 1), xx_p.reshape(1, n_pad),
      lab_p.reshape(n_pad, 1), lab_p.reshape(1, n_pad),
      feat_p, feat_T)

    return jnp.sum(block_sums[:, 0, 0]) / jnp.float32(N)


def _reference(global_feat, labels, margin):
    """Pure-JAX mirror of the PyTorch TripletLoss.forward (sanity check)."""
    x = global_feat.astype(jnp.float32)
    xx = jnp.sum(x * x, axis=1, keepdims=True)
    dist = xx + xx.T - 2.0 * (x @ x.T)
    dist = jnp.sqrt(jnp.maximum(dist, 1e-12))
    sim = (labels[:, None] == labels[None, :]).astype(jnp.float32)
    hard_p = jnp.max(dist - 9999999.0 * (1.0 - sim), axis=1)
    hard_n = jnp.min(dist + 9999999.0 * sim, axis=1)
    if margin is not None:
        return jnp.mean(jnp.maximum(hard_p - hard_n + margin, 0.0))
    return jnp.mean(jnp.log1p(jnp.exp(hard_p - hard_n)))


if __name__ == "__main__":
    key = jax.random.PRNGKey(0)
    k_feat, k_lab = jax.random.split(key)

    N, D = 8, 32
    global_feat = jax.random.normal(k_feat, (N, D), dtype=jnp.float32)
    labels = jax.random.randint(k_lab, (N,), 0, 3, dtype=jnp.int32)

    loss_soft = triplet_loss(global_feat, labels, margin=None)     # SoftMarginLoss path
    loss_margin = triplet_loss(global_feat, labels, margin=0.3)    # MarginRankingLoss path
    jax.block_until_ready((loss_soft, loss_margin))

    # Sanity check against the pure-JAX reference of the PyTorch module.
    assert jnp.allclose(loss_soft, _reference(global_feat, labels, None),
                        rtol=1e-3, atol=1e-3)
    assert jnp.allclose(loss_margin, _reference(global_feat, labels, 0.3),
                        rtol=1e-3, atol=1e-3)

    # Native-dtype path (no wrapper up-cast): bf16 features feed the MXU directly.
    loss_bf16 = triplet_loss(global_feat.astype(jnp.bfloat16), labels, margin=0.3)
    jax.block_until_ready(loss_bf16)
    assert jnp.isfinite(loss_bf16)

    print("KERNEL_OK")
</pallas_src>

<mosaic_0001>
module attributes {stable_mosaic.version = 11 : i64} {
  func.func @_triplet_kernel(%arg0: i32, %arg1: i32, %arg2: memref<64x1xf32, #tpu.memory_space<vmem>>, %arg3: memref<1x128xf32, #tpu.memory_space<vmem>>, %arg4: memref<64x1xi32, #tpu.memory_space<vmem>>, %arg5: memref<1x128xi32, #tpu.memory_space<vmem>>, %arg6: memref<64x128xf32, #tpu.memory_space<vmem>>, %arg7: memref<128x128xf32, #tpu.memory_space<vmem>>, %arg8: memref<1x8x128xf32, #tpu.memory_space<vmem>>, %arg9: memref<64x128xf32, #tpu.memory_space<vmem>>) attributes {dimension_semantics = [#tpu.dimension_semantics<parallel>, #tpu.dimension_semantics<arbitrary>], iteration_bounds = array<i64: 2, 1>, scalar_prefetch = 0 : i64, scratch_operands = 1 : i64, tpu.core_type = #tpu.core_type<tc>, window_params = [{transform_indices = @transform_0, window_bounds = array<i64: 64, 1>}, {pipeline_mode = #tpu.pipeline_mode<synchronous>, transform_indices = @transform_1, window_bounds = array<i64: 1, 128>}, {transform_indices = @transform_2, window_bounds = array<i64: 64, 1>}, {pipeline_mode = #tpu.pipeline_mode<synchronous>, transform_indices = @transform_3, window_bounds = array<i64: 1, 128>}, {transform_indices = @transform_4, window_bounds = array<i64: 64, 128>}, {transform_indices = @transform_5, window_bounds = array<i64: 128, 128>}, {transform_indices = @transform_6, window_bounds = array<i64: 1, 8, 128>}]} {
    %c0_i32 = arith.constant 0 : i32
    %0 = arith.cmpi eq, %arg1, %c0_i32 : i32
    %1 = arith.extui %0 : i1 to i32
    %c0_i32_0 = arith.constant 0 : i32
    %2 = arith.cmpi ne, %1, %c0_i32_0 : i32
    scf.if %2 {
      %cst_10 = arith.constant 0.000000e+00 : f32
      %12 = vector.broadcast %cst_10 : f32 to vector<64x128xf32>
      %c0_11 = arith.constant 0 : index
      %c0_12 = arith.constant 0 : index
      %13 = vector.load %arg9[%c0_11, %c0_12] : memref<64x128xf32, #tpu.memory_space<vmem>>, vector<64x128xf32>
      tpu.vector_store %arg9[%c0_11, %c0_12], %12 {strides = array<i32>} : memref<64x128xf32, #tpu.memory_space<vmem>>, vector<64x128xf32>,
    } else {
    }
    %c0 = arith.constant 0 : index
    %c0_1 = arith.constant 0 : index
    %3 = vector.load %arg9[%c0, %c0_1] : memref<64x128xf32, #tpu.memory_space<vmem>>, vector<64x128xf32>
    %c0_2 = arith.constant 0 : index
    %c0_3 = arith.constant 0 : index
    %4 = vector.load %arg6[%c0_2, %c0_3] : memref<64x128xf32, #tpu.memory_space<vmem>>, vector<64x128xf32>
    %c0_4 = arith.constant 0 : index
    %c0_5 = arith.constant 0 : index
    %5 = vector.load %arg7[%c0_4, %c0_5] : memref<128x128xf32, #tpu.memory_space<vmem>>, vector<128x128xf32>
    %cst = arith.constant dense<0.000000e+00> : vector<64x128xf32>
    %6 = tpu.matmul %4, %5, %cst {dimension_numbers = #tpu.dot_dimension_numbers<[1], [0], [0], [1], [0, 0, 1, 1], [], []>} : vector<64x128xf32>, vector<128x128xf32>, vector<64x128xf32> -> vector<64x128xf32>
    %7 = arith.addf %3, %6 : vector<64x128xf32>
    %c0_6 = arith.constant 0 : index
    %c0_7 = arith.constant 0 : index
    %8 = vector.load %arg9[%c0_6, %c0_7] : memref<64x128xf32, #tpu.memory_space<vmem>>, vector<64x128xf32>
    tpu.vector_store %arg9[%c0_6, %c0_7], %7 {strides = array<i32>} : memref<64x128xf32, #tpu.memory_space<vmem>>, vector<64x128xf32>,
    %c0_i32_8 = arith.constant 0 : i32
    %9 = arith.cmpi eq, %arg1, %c0_i32_8 : i32
    %10 = arith.extui %9 : i1 to i32
    %c0_i32_9 = arith.constant 0 : i32
    %11 = arith.cmpi ne, %10, %c0_i32_9 : i32
    scf.if %11 {
      %c0_10 = arith.constant 0 : index
      %c0_11 = arith.constant 0 : index
      %12 = vector.load %arg2[%c0_10, %c0_11] : memref<64x1xf32, #tpu.memory_space<vmem>>, vector<64x1xf32>
      %c0_12 = arith.constant 0 : index
      %c0_13 = arith.constant 0 : index
      %13 = vector.load %arg3[%c0_12, %c0_13] : memref<1x128xf32, #tpu.memory_space<vmem>>, vector<1x128xf32>
      %c0_14 = arith.constant 0 : index
      %c0_15 = arith.constant 0 : index
      %14 = vector.load %arg9[%c0_14, %c0_15] : memref<64x128xf32, #tpu.memory_space<vmem>>, vector<64x128xf32>
      %cst_16 = arith.constant 2.000000e+00 : f32
      %15 = vector.broadcast %cst_16 : f32 to vector<64x128xf32>
      %16 = arith.mulf %15, %14 : vector<64x128xf32>
      %17 = vector.broadcast %13 : vector<1x128xf32> to vector<64x128xf32>
      %18 = arith.subf %17, %16 : vector<64x128xf32>
      %c0_17 = arith.constant 0 : index
      %c0_18 = arith.constant 0 : index
      %19 = vector.load %arg4[%c0_17, %c0_18] : memref<64x1xi32, #tpu.memory_space<vmem>>, vector<64x1xi32>
      %c0_19 = arith.constant 0 : index
      %c0_20 = arith.constant 0 : index
      %20 = vector.load %arg5[%c0_19, %c0_20] : memref<1x128xi32, #tpu.memory_space<vmem>>, vector<1x128xi32>
      %21 = vector.broadcast %19 : vector<64x1xi32> to vector<64x128xi32>
      %22 = vector.broadcast %20 : vector<1x128xi32> to vector<64x128xi32>
      %23 = arith.cmpi eq, %21, %22 : vector<64x128xi32>
      %24 = tpu.iota {dimensions = array<i32: 1>} : vector<1x128xi32>
      %c8_i32 = arith.constant 8 : i32
      %25 = vector.broadcast %c8_i32 : i32 to vector<1x128xi32>
      %26 = arith.cmpi slt, %24, %25 : vector<1x128xi32>
      %27 = vector.broadcast %26 : vector<1x128xi1> to vector<64x128xi1>
      %28 = arith.andi %23, %27 : vector<64x128xi1>
      %cst_21 = arith.constant dense<true> : vector<64x128xi1>
      %29 = arith.xori %23, %cst_21 : vector<64x128xi1>
      %30 = vector.broadcast %26 : vector<1x128xi1> to vector<64x128xi1>
      %31 = arith.andi %29, %30 : vector<64x128xi1>
      %cst_22 = arith.constant 0xFF800000 : f32
      %32 = vector.broadcast %cst_22 : f32 to vector<64x128xf32>
      %33 = arith.select %28, %18, %32 : vector<64x128xi1>, vector<64x128xf32>
      %cst_23 = arith.constant dense<0xFF800000> : vector<64xf32>
      %34 = vector.multi_reduction <maximumf>, %33, %cst_23 [1] : vector<64x128xf32> to vector<64xf32>
      %35 = vector.shape_cast %34 : vector<64xf32> to vector<64x1xf32>
      %36 = arith.addf %35, %12 : vector<64x1xf32>
      %cst_24 = arith.constant 0x7F800000 : f32
      %37 = vector.broadcast %cst_24 : f32 to vector<64x128xf32>
      %38 = arith.select %31, %18, %37 : vector<64x128xi1>, vector<64x128xf32>
      %cst_25 = arith.constant dense<0x7F800000> : vector<64xf32>
      %39 = vector.multi_reduction <minimumf>, %38, %cst_25 [1] : vector<64x128xf32> to vector<64xf32>
      %40 = vector.shape_cast %39 : vector<64xf32> to vector<64x1xf32>
      %41 = arith.addf %40, %12 : vector<64x1xf32>
      %cst_26 = arith.constant 9.99999996E-13 : f32
      %42 = vector.broadcast %cst_26 : f32 to vector<64x1xf32>
      %43 = arith.maximumf %36, %42 : vector<64x1xf32>
      %44 = math.sqrt %43 : vector<64x1xf32>
      %cst_27 = arith.constant 9.99999996E-13 : f32
      %45 = vector.broadcast %cst_27 : f32 to vector<64x1xf32>
      %46 = arith.maximumf %41, %45 : vector<64x1xf32>
      %47 = math.sqrt %46 : vector<64x1xf32>
      %48 = arith.subf %44, %47 : vector<64x1xf32>
      %cst_28 = arith.constant 0.000000e+00 : f32
      %49 = vector.broadcast %cst_28 : f32 to vector<64x1xf32>
      %50 = arith.maximumf %48, %49 : vector<64x1xf32>
      %51 = math.absf %48 : vector<64x1xf32>
      %cst_29 = arith.constant 0.000000e+00 : f32
      %52 = vector.broadcast %cst_29 : f32 to vector<64x1xf32>
      %53 = arith.subf %52, %51 : vector<64x1xf32>
      %54 = math.exp %53 : vector<64x1xf32>
      %55 = math.log1p %54 : vector<64x1xf32>
      %56 = arith.addf %50, %55 : vector<64x1xf32>
      %57 = tpu.iota {dimensions = array<i32: 0>} : vector<64x1xi32>
      %c64_i32 = arith.constant 64 : i32
      %58 = arith.muli %arg0, %c64_i32 : i32
      %59 = vector.broadcast %58 : i32 to vector<64x1xi32>
      %60 = arith.addi %57, %59 : vector<64x1xi32>
      %c8_i32_30 = arith.constant 8 : i32
      %61 = vector.broadcast %c8_i32_30 : i32 to vector<64x1xi32>
      %62 = arith.cmpi slt, %60, %61 : vector<64x1xi32>
      %cst_31 = arith.constant 0.000000e+00 : f32
      %63 = vector.broadcast %cst_31 : f32 to vector<64x1xf32>
      %64 = arith.select %62, %56, %63 : vector<64x1xi1>, vector<64x1xf32>
      %65 = vector.shape_cast %64 : vector<64x1xf32> to vector<1x64x1xf32>
      %cst_32 = arith.constant dense<0.000000e+00> : vector<1xf32>
      %66 = vector.multi_reduction <add>, %65, %cst_32 [1, 2] : vector<1x64x1xf32> to vector<1xf32>
      %67 = vector.shape_cast %66 : vector<1xf32> to vector<1x1x1xf32>
      %68 = vector.extract %67[0, 0, 0] : f32 from vector<1x1x1xf32>
      %69 = vector.broadcast %68 : f32 to vector<1x8x128xf32>
      %c0_33 = arith.constant 0 : index
      %c0_34 = arith.constant 0 : index
      %c0_35 = arith.constant 0 : index
      %70 = vector.load %arg8[%c0_33, %c0_34, %c0_35] : memref<1x8x128xf32, #tpu.memory_space<vmem>>, vector<1x8x128xf32>
      tpu.vector_store %arg8[%c0_33, %c0_34, %c0_35], %69 {strides = array<i32>} : memref<1x8x128xf32, #tpu.memory_space<vmem>>, vector<1x8x128xf32>,
    } else {
    }
    return
  }
  func.func @transform_0(%arg0: i32, %arg1: i32) -> (i32, i32) {
    %c0_i32 = arith.constant 0 : i32
    %c0_i32_0 = arith.constant 0 : i32
    return %arg0, %c0_i32 : i32, i32
  }
  func.func @transform_1(%arg0: i32, %arg1: i32) -> (i32, i32) {
    %c0_i32 = arith.constant 0 : i32
    %c0_i32_0 = arith.constant 0 : i32
    %c0_i32_1 = arith.constant 0 : i32
    return %c0_i32, %c0_i32_0 : i32, i32
  }
  func.func @transform_2(%arg0: i32, %arg1: i32) -> (i32, i32) {
    %c0_i32 = arith.constant 0 : i32
    %c0_i32_0 = arith.constant 0 : i32
    return %arg0, %c0_i32 : i32, i32
  }
  func.func @transform_3(%arg0: i32, %arg1: i32) -> (i32, i32) {
    %c0_i32 = arith.constant 0 : i32
    %c0_i32_0 = arith.constant 0 : i32
    %c0_i32_1 = arith.constant 0 : i32
    return %c0_i32, %c0_i32_0 : i32, i32
  }
  func.func @transform_4(%arg0: i32, %arg1: i32) -> (i32, i32) {
    %c0_i32 = arith.constant 0 : i32
    return %arg0, %arg1 : i32, i32
  }
  func.func @transform_5(%arg0: i32, %arg1: i32) -> (i32, i32) {
    %c0_i32 = arith.constant 0 : i32
    %c0_i32_0 = arith.constant 0 : i32
    return %arg1, %c0_i32 : i32, i32
  }
  func.func @transform_6(%arg0: i32, %arg1: i32) -> (i32, i32, i32) {
    %c0_i32 = arith.constant 0 : i32
    %c0_i32_0 = arith.constant 0 : i32
    %c0_i32_1 = arith.constant 0 : i32
    return %arg0, %c0_i32, %c0_i32_0 : i32, i32, i32
  }
}

</mosaic_0001>

<llo_original>
// kernel: tpu_custom_call.1
$region0: #{tpu_custom_call.1}
  #allocation0 [shape = 'u32[]', space=smem, size = 0x4, offset = 0x4, fixed_abs, tag = 'smem constant byte address 0x4 - core index']
  #allocation1 [shape = 'u32[72,128]{1,0:T(1,128)}', space=vmem, size = 0x9000, scoped, tag = 'internal scratch']
  #allocation2 [shape = 'f32[64,128]{1,0:T(8,128)}', space=vmem, size = 0x8000, scoped, tag = 'scratch operand']
  %s0 = inlined_call_operand.vmem [shape: f32[128,1], index: 0, kind: input, shape index: {}]
  %s1 = inlined_call_operand.vmem [shape: f32[1,128], index: 1, kind: input, shape index: {}]
  %s2 = inlined_call_operand.vmem [shape: s32[128,1], index: 2, kind: input, shape index: {}]
  %s3 = inlined_call_operand.vmem [shape: s32[1,128], index: 3, kind: input, shape index: {}]
  %s4 = inlined_call_operand.vmem [shape: f32[128,128], index: 4, kind: input, shape index: {}]
  %s5 = inlined_call_operand.vmem [shape: f32[128,128], index: 5, kind: input, shape index: {}]
  %s6 = inlined_call_operand.hbm [shape: f32[2,8,128], index: 6, kind: output, shape index: {}]
  %s7 = sld [smem:[#allocation0]]
  $region65: #{tpu_custom_call.1} parent=0
    _
  %s9 = ssub.s32 1, %s7
  %s10 = scalar_select 0, %s9, %s7
  $region1: #{tpu_custom_call.1} parent=0
    #allocation3 [shape = 'u8[8192]{0}', space=vmem, size = 0x2000, scoped, tag = 'output window, operand 0']
    #allocation4 [shape = 's32[2]{0}', space=sflag, size = 0x8, scoped, tag = 'scoped memory for tpu_custom_call.1']
    %11 = vsyncpa [#allocation4], 0
    %s12 = scalar_lea.sflag [#allocation4], 1
    %13 = vsyncpa %s12, 0
    loop: start=0, step=1, limit=4
    $region2: #{tpu_custom_call.1} parent=1 // loop_pre_header
      _
    $region3: #{tpu_custom_call.1} parent=1 // loop_header
      %s15 = sphi 0, %s19
      %p16 = scmp.ge.s32.totalorder %s15, 4
      %s22 = sphi 0, %s34
      %s23 = sphi 0, %s30
      %s24 = sphi 0, %s22
      %s25 = sphi 0, %s23
      %s26 = sphi 0, %s24
      %s27 = sphi 0, %s25
      %s37 = sphi 0, %s39
      %s40 = sphi 0, %s37
      %s41 = sphi 0, %s40
      %s57 = sphi 0, %s41
      %s61 = sphi 0, %s61
      %s63 = sphi 0, %s61
      %s64 = sphi 0, %s63
      %s78 = sphi 0, %s64
      %s84 = sphi 0, %s86
      %s87 = sphi 0, %s84
      %s88 = sphi 0, %s87
      %s104 = sphi 0, %s88
      %s108 = sphi 0, %s108
      %s110 = sphi 0, %s108
      %s111 = sphi 0, %s110
      %s125 = sphi 0, %s111
      %s133 = sphi 0, %s135
      %s136 = sphi 0, %s133
      %s137 = sphi 0, %s136
      %s153 = sphi 0, %s137
      %s159 = sphi 0, %s161
      %s162 = sphi 0, %s159
      %s163 = sphi 0, %s162
      %s179 = sphi 0, %s163
      %s185 = sphi 0, %s187
      %s188 = sphi 0, %s185
      %s189 = sphi 0, %s188
      %s205 = sphi 0, %s189
    $region4: #{tpu_custom_call.1} parent=1 // loop_header_branch
      %18 = sbr.rel (%p16) target = $region8
    $region5: #{tpu_custom_call.1} parent=1 // loop_body
      %s20 = ssub.s32 %s15, 1
      %s21 = ssub.s32 %s15, 2
      %s28 = sadd.s32 1, %s23
      %p29 = scmp.ge.s32.totalorder %s28, 1
      %s30 = scalar_select %p29, 0, %s28
      %s31 = sadd.s32 1, %s22
      %s32 = scalar_select %p29, %s31, %s22
      %p33 = scmp.ge.s32.totalorder %s32, 2
      %s34 = scalar_select %p33, 0, %s32
      %s35 = ssub.s32 %s22, %s34
      %p36 = scmp.eq.s32.totalorder %s35, 0
      %s38 = sadd.s32 %s37, 1
      %s39 = scalar_select %p36, %s37, %s38
      %p42 = pneg %p36
      %p43 = scmp.eq.s32.totalorder %s15, 1
      %p44 = por %p42, %p43
      %p45 = scmp.ne.s32.totalorder %s37, %s40
      %p46 = scmp.eq.s32.totalorder %s15, 0
      %p47 = por %p45, %p46
      %p48 = scmp.ne.s32.totalorder %s37, %s40
      %p49 = scmp.eq.s32.totalorder %s20, 1
      %p50 = por %p48, %p49
      %p51 = scmp.ne.s32.totalorder %s40, %s41
      %p52 = scmp.eq.s32.totalorder %s20, 0
      %p53 = por %p51, %p52
      %p54 = scmp.ne.s32.totalorder %s40, %s41
      %p55 = scmp.eq.s32.totalorder %s21, 1
      %p56 = por %p54, %p55
      %p58 = scmp.ne.s32.totalorder %s41, %s57
      %p59 = scmp.eq.s32.totalorder %s21, 0
      %p60 = por %p58, %p59
      %s62 = sadd.s32 %s61, 1
      %p65 = scmp.eq.s32.totalorder %s15, 1
      %p66 = scmp.ne.s32.totalorder %s61, %s63
      %p67 = scmp.eq.s32.totalorder %s15, 0
      %p68 = por %p66, %p67
      %p69 = scmp.ne.s32.totalorder %s61, %s63
      %p70 = scmp.eq.s32.totalorder %s20, 1
      %p71 = por %p69, %p70
      %p72 = scmp.ne.s32.totalorder %s63, %s64
      %p73 = scmp.eq.s32.totalorder %s20, 0
      %p74 = por %p72, %p73
      %p75 = scmp.ne.s32.totalorder %s63, %s64
      %p76 = scmp.eq.s32.totalorder %s21, 1
      %p77 = por %p75, %p76
      %p79 = scmp.ne.s32.totalorder %s64, %s78
      %p80 = scmp.eq.s32.totalorder %s21, 0
      %p81 = por %p79, %p80
      %s82 = ssub.s32 %s22, %s34
      %p83 = scmp.eq.s32.totalorder %s82, 0
      %s85 = sadd.s32 %s84, 1
      %s86 = scalar_select %p83, %s84, %s85
      %p89 = pneg %p83
      %p90 = scmp.eq.s32.totalorder %s15, 1
      %p91 = por %p89, %p90
      %p92 = scmp.ne.s32.totalorder %s84, %s87
      %p93 = scmp.eq.s32.totalorder %s15, 0
      %p94 = por %p92, %p93
      %p95 = scmp.ne.s32.totalorder %s84, %s87
      %p96 = scmp.eq.s32.totalorder %s20, 1
      %p97 = por %p95, %p96
      %p98 = scmp.ne.s32.totalorder %s87, %s88
      %p99 = scmp.eq.s32.totalorder %s20, 0
      %p100 = por %p98, %p99
      %p101 = scmp.ne.s32.totalorder %s87, %s88
      %p102 = scmp.eq.s32.totalorder %s21, 1
      %p103 = por %p101, %p102
      %p105 = scmp.ne.s32.totalorder %s88, %s104
      %p106 = scmp.eq.s32.totalorder %s21, 0
      %p107 = por %p105, %p106
      %s109 = sadd.s32 %s108, 1
      %p112 = scmp.eq.s32.totalorder %s15, 1
      %p113 = scmp.ne.s32.totalorder %s108, %s110
      %p114 = scmp.eq.s32.totalorder %s15, 0
      %p115 = por %p113, %p114
      %p116 = scmp.ne.s32.totalorder %s108, %s110
      %p117 = scmp.eq.s32.totalorder %s20, 1
      %p118 = por %p116, %p117
      %p119 = scmp.ne.s32.totalorder %s110, %s111
      %p120 = scmp.eq.s32.totalorder %s20, 0
      %p121 = por %p119, %p120
      %p122 = scmp.ne.s32.totalorder %s110, %s111
      %p123 = scmp.eq.s32.totalorder %s21, 1
      %p124 = por %p122, %p123
      %p126 = scmp.ne.s32.totalorder %s111, %s125
      %p127 = scmp.eq.s32.totalorder %s21, 0
      %p128 = por %p126, %p127
      %s129 = ssub.s32 %s22, %s34
      %s130 = ssub.s32 %s23, %s30
      %s131 = sor.u32 %s129, %s130
      %p132 = scmp.eq.s32.totalorder %s131, 0
      %s134 = sadd.s32 %s133, 1
      %s135 = scalar_select %p132, %s133, %s134
      %p138 = pneg %p132
      %p139 = scmp.eq.s32.totalorder %s15, 1
      %p140 = por %p138, %p139
      %p141 = scmp.ne.s32.totalorder %s133, %s136
      %p142 = scmp.eq.s32.totalorder %s15, 0
      %p143 = por %p141, %p142
      %p144 = scmp.ne.s32.totalorder %s133, %s136
      %p145 = scmp.eq.s32.totalorder %s20, 1
      %p146 = por %p144, %p145
      %p147 = scmp.ne.s32.totalorder %s136, %s137
      %p148 = scmp.eq.s32.totalorder %s20, 0
      %p149 = por %p147, %p148
      %p150 = scmp.ne.s32.totalorder %s136, %s137
      %p151 = scmp.eq.s32.totalorder %s21, 1
      %p152 = por %p150, %p151
      %p154 = scmp.ne.s32.totalorder %s137, %s153
      %p155 = scmp.eq.s32.totalorder %s21, 0
      %p156 = por %p154, %p155
      %s157 = ssub.s32 %s23, %s30
      %p158 = scmp.eq.s32.totalorder %s157, 0
      %s160 = sadd.s32 %s159, 1
      %s161 = scalar_select %p158, %s159, %s160
      %p164 = pneg %p158
      %p165 = scmp.eq.s32.totalorder %s15, 1
      %p166 = por %p164, %p165
      %p167 = scmp.ne.s32.totalorder %s159, %s162
      %p168 = scmp.eq.s32.totalorder %s15, 0
      %p169 = por %p167, %p168
      %p170 = scmp.ne.s32.totalorder %s159, %s162
      %p171 = scmp.eq.s32.totalorder %s20, 1
      %p172 = por %p170, %p171
      %p173 = scmp.ne.s32.totalorder %s162, %s163
      %p174 = scmp.eq.s32.totalorder %s20, 0
      %p175 = por %p173, %p174
      %p176 = scmp.ne.s32.totalorder %s162, %s163
      %p177 = scmp.eq.s32.totalorder %s21, 1
      %p178 = por %p176, %p177
      %p180 = scmp.ne.s32.totalorder %s163, %s179
      %p181 = scmp.eq.s32.totalorder %s21, 0
      %p182 = por %p180, %p181
      %s183 = ssub.s32 %s22, %s34
      %p184 = scmp.eq.s32.totalorder %s183, 0
      %s186 = sadd.s32 %s185, 1
      %s187 = scalar_select %p184, %s185, %s186
      %p190 = pneg %p184
      %p191 = scmp.eq.s32.totalorder %s15, 1
      %p192 = por %p190, %p191
      %p193 = scmp.ne.s32.totalorder %s185, %s188
      %p194 = scmp.eq.s32.totalorder %s15, 0
      %p195 = por %p193, %p194
      %p196 = scmp.ne.s32.totalorder %s185, %s188
      %p197 = scmp.eq.s32.totalorder %s20, 1
      %p198 = por %p196, %p197
      %p199 = scmp.ne.s32.totalorder %s188, %s189
      %p200 = scmp.eq.s32.totalorder %s20, 0
      %p201 = por %p199, %p200
      %p202 = scmp.ne.s32.totalorder %s188, %s189
      %p203 = scmp.eq.s32.totalorder %s21, 1
      %p204 = por %p202, %p203
      %p206 = scmp.ne.s32.totalorder %s189, %s205
      %p207 = scmp.eq.s32.totalorder %s21, 0
      %p208 = por %p206, %p207
      %p209 = scmp.le.s32.totalorder 1, %s15
      %p210 = scmp.lt.s32.totalorder %s15, 3
      %p211 = pnand %p209, %p210
      %p212 = pneg %p211
      // Predicated region
      $region9: #{tpu_custom_call.1} parent=5 // pred_check
        _
      $region10: #{tpu_custom_call.1} parent=5 // pred_check_branch
        %214 = sbr.rel (%p211) target = $region12
      $region11: #{tpu_custom_call.1} parent=5 // pred_region
        %s215 = ssub.s32 %s15, 1
        // Predicated region
        $region13: #{tpu_custom_call.1} parent=11 // pred_check
          %p216 = pneg %p74
        $region14: #{tpu_custom_call.1} parent=11 // pred_check_branch
          %218 = sbr.rel (%p216) target = $region16
        $region15: #{tpu_custom_call.1} parent=11 // pred_region
          _
        $region16: #{tpu_custom_call.1} parent=11 // pred_fallthru
          _
        // Predicated region
        $region17: #{tpu_custom_call.1} parent=11 // pred_check
          %p219 = pneg %p121
        $region18: #{tpu_custom_call.1} parent=11 // pred_check_branch
          %221 = sbr.rel (%p219) target = $region20
        $region19: #{tpu_custom_call.1} parent=11 // pred_region
          _
        $region20: #{tpu_custom_call.1} parent=11 // pred_fallthru
          _
        // Predicated region
        $region21: #{tpu_custom_call.1} parent=11 // pred_check
          %p222 = pneg %p175
        $region22: #{tpu_custom_call.1} parent=11 // pred_check_branch
          %224 = sbr.rel (%p222) target = $region24
        $region23: #{tpu_custom_call.1} parent=11 // pred_region
          %s225 = smul.u32 16, %s25
          %p226 = scmp.lt.s32.totalorder %s225, 15
          %s227 = scalar_select %p226, %s225, 15
          %s228 = smul.addr %s227, 8
          %s229 = scalar_lea.vmem %s5, %s228
          %s230 = smul.u32 16, %s25
        $region24: #{tpu_custom_call.1} parent=11 // pred_fallthru
          _
      $region12: #{tpu_custom_call.1} parent=5 // pred_fallthru
        _
      %p231 = scmp.lt.s32.totalorder %s15, 2
      // Predicated region
      $region25: #{tpu_custom_call.1} parent=5 // pred_check
        %p232 = pneg %p231
      $region26: #{tpu_custom_call.1} parent=5 // pred_check_branch
        %234 = sbr.rel (%p232) target = $region28
      $region27: #{tpu_custom_call.1} parent=5 // pred_region
        // Predicated region
        $region29: #{tpu_custom_call.1} parent=27 // pred_check
          %p235 = pneg %p47
        $region30: #{tpu_custom_call.1} parent=27 // pred_check_branch
          %237 = sbr.rel (%p235) target = $region32
        $region31: #{tpu_custom_call.1} parent=27 // pred_region
          %s238 = smul.u32 8, %s22
          %p239 = scmp.lt.s32.totalorder %s238, 15
          %s240 = scalar_select %p239, %s238, 15
          %s241 = smul.addr %s240, 8
          %s242 = scalar_lea.vmem %s0, %s241
          %s243 = smul.u32 8, %s22
        $region32: #{tpu_custom_call.1} parent=27 // pred_fallthru
          _
        // Predicated region
        $region33: #{tpu_custom_call.1} parent=27 // pred_check
          %p244 = pneg %p94
        $region34: #{tpu_custom_call.1} parent=27 // pred_check_branch
          %246 = sbr.rel (%p244) target = $region36
        $region35: #{tpu_custom_call.1} parent=27 // pred_region
          %s247 = smul.u32 8, %s22
          %p248 = scmp.lt.s32.totalorder %s247, 15
          %s249 = scalar_select %p248, %s247, 15
          %s250 = smul.addr %s249, 8
          %s251 = scalar_lea.vmem %s2, %s250
          %s252 = smul.u32 8, %s22
        $region36: #{tpu_custom_call.1} parent=27 // pred_fallthru
          _
        // Predicated region
        $region37: #{tpu_custom_call.1} parent=27 // pred_check
          %p253 = pneg %p143
        $region38: #{tpu_custom_call.1} parent=27 // pred_check_branch
          %255 = sbr.rel (%p253) target = $region40
        $region39: #{tpu_custom_call.1} parent=27 // pred_region
          %s256 = smul.u32 8, %s22
          %p257 = scmp.lt.s32.totalorder %s256, 15
          %s258 = scalar_select %p257, %s256, 15
          %p259 = scmp.lt.s32.totalorder %s23, 0
          %s260 = scalar_select %p259, %s23, 0
          %s261 = sadd.s32 %s260, %s258
          %s262 = smul.addr %s261, 8
          %s263 = scalar_lea.vmem %s4, %s262
          %s264 = smul.u32 8, %s22
        $region40: #{tpu_custom_call.1} parent=27 // pred_fallthru
          _
      $region28: #{tpu_custom_call.1} parent=5 // pred_fallthru
        _
      %p265 = scmp.le.s32.totalorder 1, %s15
      %p266 = scmp.lt.s32.totalorder %s15, 3
      %p267 = pnand %p265, %p266
      %p268 = pneg %p267
      // Predicated region
      $region41: #{tpu_custom_call.1} parent=5 // pred_check
        _
      $region42: #{tpu_custom_call.1} parent=5 // pred_check_branch
        %270 = sbr.rel (%p267) target = $region44
      $region43: #{tpu_custom_call.1} parent=5 // pred_region
        %s271 = ssub.s32 %s15, 1
        %s272 = smul.u32 8, %s24
        %p273 = scmp.lt.s32.totalorder %s272, 15
        %s274 = scalar_select %p273, %s272, 15
        %s275 = smul.addr %s274, 8
        %s276 = scalar_lea.vmem %s0, %s275
        %p277 = pneg %p53
        %p278 = pneg %p50
        %p279 = pneg %p74
        %p280 = pneg %p71
        %s281 = smul.u32 8, %s24
        %p282 = scmp.lt.s32.totalorder %s281, 15
        %s283 = scalar_select %p282, %s281, 15
        %s284 = smul.addr %s283, 8
        %s285 = scalar_lea.vmem %s2, %s284
        %p286 = pneg %p100
        %p287 = pneg %p97
        %p288 = pneg %p121
        %p289 = pneg %p118
        %s290 = smul.u32 8, %s24
        %p291 = scmp.lt.s32.totalorder %s290, 15
        %s292 = scalar_select %p291, %s290, 15
        %p293 = scmp.lt.s32.totalorder %s25, 0
        %s294 = scalar_select %p293, %s25, 0
        %s295 = sadd.s32 %s294, %s292
        %s296 = smul.addr %s295, 8
        %s297 = scalar_lea.vmem %s4, %s296
        %p298 = pneg %p149
        %p299 = pneg %p146
        %s300 = smul.u32 16, %s25
        %p301 = scmp.lt.s32.totalorder %s300, 15
        %s302 = scalar_select %p301, %s300, 15
        %s303 = smul.addr %s302, 8
        %s304 = scalar_lea.vmem %s5, %s303
        %p305 = pneg %p175
        %p306 = pneg %p172
        %p307 = pneg %p201
        %p308 = pneg %p198
        %s309 = sand.u32 %s188, 1
        %s310 = scalar_lea.sflag [#allocation4], %s309
        %s311 = sand.u32 %s188, 1
        %s312 = smul.addr %s311, 8
        %s313 = scalar_lea.vmem [#allocation3], %s312
        %s314 = smul.u32 8, %s24
        %p315 = scmp.lt.s32.totalorder %s314, 15
        %s316 = scalar_select %p315, %s314, 15
        %s317 = smul.addr %s316, 8
        %s318 = scalar_lea.vmem %s0, %s317
        %s319 = smul.u32 8, %s24
        %s320 = smul.u32 8, %s24
        %p321 = scmp.lt.s32.totalorder %s320, 15
        %s322 = scalar_select %p321, %s320, 15
        %s323 = smul.addr %s322, 8
        %s324 = scalar_lea.vmem %s2, %s323
        %s325 = smul.u32 8, %s24
        %s326 = smul.u32 8, %s24
        %p327 = scmp.lt.s32.totalorder %s326, 15
        %s328 = scalar_select %p327, %s326, 15
        %p329 = scmp.lt.s32.totalorder %s25, 0
        %s330 = scalar_select %p329, %s25, 0
        %s331 = sadd.s32 %s330, %s328
        %s332 = smul.addr %s331, 8
        %s333 = scalar_lea.vmem %s4, %s332
        %s334 = smul.u32 8, %s24
        %s335 = smul.u32 16, %s25
        %p336 = scmp.lt.s32.totalorder %s335, 15
        %s337 = scalar_select %p336, %s335, 15
        %s338 = smul.addr %s337, 8
        %s339 = scalar_lea.vmem %s5, %s338
        %s340 = smul.u32 16, %s25
        %p341 = scmp.eq.s32.totalorder %s25, 0
        // Predicated region
        $region45: #{tpu_custom_call.1} parent=43 // pred_check
          %p342 = pneg %p341
        $region46: #{tpu_custom_call.1} parent=43 // pred_check_branch
          %344 = sbr.rel (%p342) target = $region48
        $region47: #{tpu_custom_call.1} parent=43 // pred_region
          %345 = vst [vmem:[#allocation2] sm:$0xff] 0.0
          %346 = vst [vmem:[#allocation2 + $0x8] sm:$0xff] 0.0
          %347 = vst [vmem:[#allocation2 + $0x10] sm:$0xff] 0.0
          %348 = vst [vmem:[#allocation2 + $0x18] sm:$0xff] 0.0
          %349 = vst [vmem:[#allocation2 + $0x20] sm:$0xff] 0.0
          %350 = vst [vmem:[#allocation2 + $0x28] sm:$0xff] 0.0
          %351 = vst [vmem:[#allocation2 + $0x30] sm:$0xff] 0.0
          %352 = vst [vmem:[#allocation2 + $0x38] sm:$0xff] 0.0
        $region48: #{tpu_custom_call.1} parent=43 // pred_fallthru
          _
        %v353 = vld [vmem:[#allocation2] sm:$0xff]
        %v354 = vld [vmem:[#allocation2 + $0x8] sm:$0xff]
        %v355 = vld [vmem:[#allocation2 + $0x10] sm:$0xff]
        %v356 = vld [vmem:[#allocation2 + $0x18] sm:$0xff]
        %v357 = vld [vmem:[#allocation2 + $0x20] sm:$0xff]
        %v358 = vld [vmem:[#allocation2 + $0x28] sm:$0xff]
        %v359 = vld [vmem:[#allocation2 + $0x30] sm:$0xff]
        %v360 = vld [vmem:[#allocation2 + $0x38] sm:$0xff]
        %v361 = vld [vmem:[%s333] sm:$0xff]
        %v362 = vld [vmem:[%s333 + $0x8] sm:$0xff]
        %v363 = vld [vmem:[%s333 + $0x10] sm:$0xff]
        %v364 = vld [vmem:[%s333 + $0x18] sm:$0xff]
        %v365 = vld [vmem:[%s333 + $0x20] sm:$0xff]
        %v366 = vld [vmem:[%s333 + $0x28] sm:$0xff]
        %v367 = vld [vmem:[%s333 + $0x30] sm:$0xff]
        %v368 = vld [vmem:[%s333 + $0x38] sm:$0xff]
        %v369 = vld [vmem:[%s339] sm:$0xff]
        %v370 = vld [vmem:[%s339 + $0x8] sm:$0xff]
        %v371 = vld [vmem:[%s339 + $0x10] sm:$0xff]
        %v372 = vld [vmem:[%s339 + $0x18] sm:$0xff]
        %v373 = vld [vmem:[%s339 + $0x20] sm:$0xff]
        %v374 = vld [vmem:[%s339 + $0x28] sm:$0xff]
        %v375 = vld [vmem:[%s339 + $0x30] sm:$0xff]
        %v376 = vld [vmem:[%s339 + $0x38] sm:$0xff]
        %v377 = vld [vmem:[%s339 + $0x40] sm:$0xff]
        %v378 = vld [vmem:[%s339 + $0x48] sm:$0xff]
        %v379 = vld [vmem:[%s339 + $0x50] sm:$0xff]
        %v380 = vld [vmem:[%s339 + $0x58] sm:$0xff]
        %v381 = vld [vmem:[%s339 + $0x60] sm:$0xff]
        %v382 = vld [vmem:[%s339 + $0x68] sm:$0xff]
        %v383 = vld [vmem:[%s339 + $0x70] sm:$0xff]
        %v384 = vld [vmem:[%s339 + $0x78] sm:$0xff]
        %385 = vmatpush.msra.mxu0 %v384
        %386 = vmatpush.msra.mxu0 %v383
        %387 = vmatpush.msra.mxu0 %v382
        %388 = vmatpush.msra.mxu0 %v381
        %389 = vmatpush.msra.mxu0 %v380
        %390 = vmatpush.msra.mxu0 %v379
        %391 = vmatpush.msra.mxu0 %v378
        %392 = vmatpush.msra.mxu0 %v377
        %393 = vmatpush.msra.mxu0 %v376
        %394 = vmatpush.msra.mxu0 %v375
        %395 = vmatpush.msra.mxu0 %v374
        %396 = vmatpush.msra.mxu0 %v373
        %397 = vmatpush.msra.mxu0 %v372
        %398 = vmatpush.msra.mxu0 %v371
        %399 = vmatpush.msra.mxu0 %v370
        %400 = vmatpush.msra.mxu0 %v369
        %401 = vmatmul.f32.gmra.mxu0 %v361
        %v402 = vpop.f32.mrf.mxu0
        %v403 = vadd.f32 0.0, %v402
        %404 = vmatmul.f32.gmra.mxu0 %v362
        %v405 = vpop.f32.mrf.mxu0
        %v406 = vadd.f32 0.0, %v405
        %407 = vmatmul.f32.gmra.mxu0 %v363
        %v408 = vpop.f32.mrf.mxu0
        %v409 = vadd.f32 0.0, %v408
        %410 = vmatmul.f32.gmra.mxu0 %v364
        %v411 = vpop.f32.mrf.mxu0
        %v412 = vadd.f32 0.0, %v411
        %413 = vmatmul.f32.gmra.mxu0 %v365
        %v414 = vpop.f32.mrf.mxu0
        %v415 = vadd.f32 0.0, %v414
        %416 = vmatmul.f32.gmra.mxu0 %v366
        %v417 = vpop.f32.mrf.mxu0
        %v418 = vadd.f32 0.0, %v417
        %419 = vmatmul.f32.gmra.mxu0 %v367
        %v420 = vpop.f32.mrf.mxu0
        %v421 = vadd.f32 0.0, %v420
        %422 = vmatmul.f32.gmra.mxu0 %v368
        %v423 = vpop.f32.mrf.mxu0
        %v424 = vadd.f32 0.0, %v423
        %425 = vdwg.mxu0
        %v426 = vadd.f32 %v353, %v403
        %v427 = vadd.f32 %v354, %v406
        %v428 = vadd.f32 %v355, %v409
        %v429 = vadd.f32 %v356, %v412
        %v430 = vadd.f32 %v357, %v415
        %v431 = vadd.f32 %v358, %v418
        %v432 = vadd.f32 %v359, %v421
        %v433 = vadd.f32 %v360, %v424
        %434 = vst [vmem:[#allocation2] sm:$0xff] %v426
        %435 = vst [vmem:[#allocation2 + $0x8] sm:$0xff] %v427
        %436 = vst [vmem:[#allocation2 + $0x10] sm:$0xff] %v428
        %437 = vst [vmem:[#allocation2 + $0x18] sm:$0xff] %v429
        %438 = vst [vmem:[#allocation2 + $0x20] sm:$0xff] %v430
        %439 = vst [vmem:[#allocation2 + $0x28] sm:$0xff] %v431
        %440 = vst [vmem:[#allocation2 + $0x30] sm:$0xff] %v432
        %441 = vst [vmem:[#allocation2 + $0x38] sm:$0xff] %v433
        // Predicated region
        $region49: #{tpu_custom_call.1} parent=43 // pred_check
          %p442 = pneg %p341
        $region50: #{tpu_custom_call.1} parent=43 // pred_check_branch
          %444 = sbr.rel (%p442) target = $region52
        $region51: #{tpu_custom_call.1} parent=43 // pred_region
          %v445 = vld [vmem:[%s318] sm:$0xff]
          %v446 = vld [vmem:[%s318 + $0x8] sm:$0xff]
          %v447 = vld [vmem:[%s318 + $0x10] sm:$0xff]
          %v448 = vld [vmem:[%s318 + $0x18] sm:$0xff]
          %v449 = vld [vmem:[%s318 + $0x20] sm:$0xff]
          %v450 = vld [vmem:[%s318 + $0x28] sm:$0xff]
          %v451 = vld [vmem:[%s318 + $0x30] sm:$0xff]
          %v452 = vld [vmem:[%s318 + $0x38] sm:$0xff]
          %v453 = vld [vmem:[%s1] sm:$0x1]
          %v454 = vld [vmem:[#allocation2] sm:$0xff]
          %v455 = vld [vmem:[#allocation2 + $0x8] sm:$0xff]
          %v456 = vld [vmem:[#allocation2 + $0x10] sm:$0xff]
          %v457 = vld [vmem:[#allocation2 + $0x18] sm:$0xff]
          %v458 = vld [vmem:[#allocation2 + $0x20] sm:$0xff]
          %v459 = vld [vmem:[#allocation2 + $0x28] sm:$0xff]
          %v460 = vld [vmem:[#allocation2 + $0x30] sm:$0xff]
          %v461 = vld [vmem:[#allocation2 + $0x38] sm:$0xff]
          %v462 = vmul.f32 %v454, 2.0
          %v463 = vmul.f32 %v455, 2.0
          %v464 = vmul.f32 %v456, 2.0
          %v465 = vmul.f32 %v457, 2.0
          %v466 = vmul.f32 %v458, 2.0
          %v467 = vmul.f32 %v459, 2.0
          %v468 = vmul.f32 %v460, 2.0
          %v469 = vmul.f32 %v461, 2.0
          %v471 = vperm.slane %v453, 0
          %v473 = vsub.f32 %v471, %v462
          %v474 = vsub.f32 %v471, %v463
          %v475 = vsub.f32 %v471, %v464
          %v476 = vsub.f32 %v471, %v465
          %v477 = vsub.f32 %v471, %v466
          %v478 = vsub.f32 %v471, %v467
          %v479 = vsub.f32 %v471, %v468
          %v480 = vsub.f32 %v471, %v469
          %v481 = vld [vmem:[%s324] sm:$0xff]
          %v482 = vld [vmem:[%s324 + $0x8] sm:$0xff]
          %v483 = vld [vmem:[%s324 + $0x10] sm:$0xff]
          %v484 = vld [vmem:[%s324 + $0x18] sm:$0xff]
          %v485 = vld [vmem:[%s324 + $0x20] sm:$0xff]
          %v486 = vld [vmem:[%s324 + $0x28] sm:$0xff]
          %v487 = vld [vmem:[%s324 + $0x30] sm:$0xff]
          %v488 = vld [vmem:[%s324 + $0x38] sm:$0xff]
          %v489 = vld [vmem:[%s3] sm:$0x1]
          %490 = vset.pattern.permute.xlu0 0
          %491 = vperm.xlu0 %490, %v481
          %v492 = vpop.permute.xlu0 %491
          %493 = vset.pattern.permute.xlu0 0
          %494 = vperm.xlu0 %493, %v482
          %v495 = vpop.permute.xlu0 %494
          %496 = vset.pattern.permute.xlu0 0
          %497 = vperm.xlu0 %496, %v483
          %v498 = vpop.permute.xlu0 %497
          %499 = vset.pattern.permute.xlu0 0
          %500 = vperm.xlu0 %499, %v484
          %v501 = vpop.permute.xlu0 %500
          %502 = vset.pattern.permute.xlu0 0
          %503 = vperm.xlu0 %502, %v485
          %v504 = vpop.permute.xlu0 %503
          %505 = vset.pattern.permute.xlu0 0
          %506 = vperm.xlu0 %505, %v486
          %v507 = vpop.permute.xlu0 %506
          %508 = vset.pattern.permute.xlu0 0
          %509 = vperm.xlu0 %508, %v487
          %v510 = vpop.permute.xlu0 %509
          %511 = vset.pattern.permute.xlu0 0
          %512 = vperm.xlu0 %511, %v488
          %v513 = vpop.permute.xlu0 %512
          %v514 = vperm.slane %v489, 0
          %vm515 = vcmp.eq.s32.totalorder %v492, %v514
          %vm516 = vcmp.eq.s32.totalorder %v495, %v514
          %vm517 = vcmp.eq.s32.totalorder %v498, %v514
          %vm518 = vcmp.eq.s32.totalorder %v501, %v514
          %vm519 = vcmp.eq.s32.totalorder %v504, %v514
          %vm520 = vcmp.eq.s32.totalorder %v507, %v514
          %vm521 = vcmp.eq.s32.totalorder %v510, %v514
          %vm522 = vcmp.eq.s32.totalorder %v513, %v514
          %v523 = vlaneseq
          %v524 = vand.u32 %v523, 127
          %vm525 = vcmp.lt.s32.totalorder %v524, 8
          %v526 = vsel %vm525, 1, 0
          %vm527 = vcmp.eq.s32.totalorder %v526, 1
          %vm528 = vmand %vm515, %vm527
          %vm529 = vmand %vm516, %vm527
          %vm530 = vmand %vm517, %vm527
          %vm531 = vmand %vm518, %vm527
          %vm532 = vmand %vm519, %vm527
          %vm533 = vmand %vm520, %vm527
          %vm534 = vmand %vm521, %vm527
          %vm535 = vmand %vm522, %vm527
          %vm536 = vmxor %vm515, 1
          %vm537 = vmxor %vm516, 1
          %vm538 = vmxor %vm517, 1
          %vm539 = vmxor %vm518, 1
          %vm540 = vmxor %vm519, 1
          %vm541 = vmxor %vm520, 1
          %vm542 = vmxor %vm521, 1
          %vm543 = vmxor %vm522, 1
          %vm544 = vmand %vm536, %vm527
          %vm545 = vmand %vm537, %vm527
          %vm546 = vmand %vm538, %vm527
          %vm547 = vmand %vm539, %vm527
          %vm548 = vmand %vm540, %vm527
          %vm549 = vmand %vm541, %vm527
          %vm550 = vmand %vm542, %vm527
          %vm551 = vmand %vm543, %vm527
          %v552 = vsel %vm528, %v473, -inf
          %v553 = vsel %vm529, %v474, -inf
          %v554 = vsel %vm530, %v475, -inf
          %v555 = vsel %vm531, %v476, -inf
          %v556 = vsel %vm532, %v477, -inf
          %v557 = vsel %vm533, %v478, -inf
          %v558 = vsel %vm534, %v479, -inf
          %v559 = vsel %vm535, %v480, -inf
          %560 = vmax.xlane.f32.xlu0 %v552
          %v561 = vpop.xlane.xlu0 %560
          %562 = vmax.xlane.f32.xlu0 %v553
          %v563 = vpop.xlane.xlu0 %562
          %564 = vmax.xlane.f32.xlu0 %v554
          %v565 = vpop.xlane.xlu0 %564
          %566 = vmax.xlane.f32.xlu0 %v555
          %v567 = vpop.xlane.xlu0 %566
          %568 = vmax.xlane.f32.xlu0 %v556
          %v569 = vpop.xlane.xlu0 %568
          %570 = vmax.xlane.f32.xlu0 %v557
          %v571 = vpop.xlane.xlu0 %570
          %572 = vmax.xlane.f32.xlu0 %v558
          %v573 = vpop.xlane.xlu0 %572
          %574 = vmax.xlane.f32.xlu0 %v559
          %v575 = vpop.xlane.xlu0 %574
          %v576 = vadd.f32 %v561, %v445
          %v577 = vadd.f32 %v563, %v446
          %v578 = vadd.f32 %v565, %v447
          %v579 = vadd.f32 %v567, %v448
          %v580 = vadd.f32 %v569, %v449
          %v581 = vadd.f32 %v571, %v450
          %v582 = vadd.f32 %v573, %v451
          %v583 = vadd.f32 %v575, %v452
          %v584 = vsel %vm544, %v473, inf
          %v585 = vsel %vm545, %v474, inf
          %v586 = vsel %vm546, %v475, inf
          %v587 = vsel %vm547, %v476, inf
          %v588 = vsel %vm548, %v477, inf
          %v589 = vsel %vm549, %v478, inf
          %v590 = vsel %vm550, %v479, inf
          %v591 = vsel %vm551, %v480, inf
          %592 = vmin.xlane.f32.xlu0 %v584
          %v593 = vpop.xlane.xlu0 %592
          %594 = vmin.xlane.f32.xlu0 %v585
          %v595 = vpop.xlane.xlu0 %594
          %596 = vmin.xlane.f32.xlu0 %v586
          %v597 = vpop.xlane.xlu0 %596
          %598 = vmin.xlane.f32.xlu0 %v587
          %v599 = vpop.xlane.xlu0 %598
          %600 = vmin.xlane.f32.xlu0 %v588
          %v601 = vpop.xlane.xlu0 %600
          %602 = vmin.xlane.f32.xlu0 %v589
          %v603 = vpop.xlane.xlu0 %602
          %604 = vmin.xlane.f32.xlu0 %v590
          %v605 = vpop.xlane.xlu0 %604
          %606 = vmin.xlane.f32.xlu0 %v591
          %v607 = vpop.xlane.xlu0 %606
          %v608 = vadd.f32 %v593, %v445
          %v609 = vadd.f32 %v595, %v446
          %v610 = vadd.f32 %v597, %v447
          %v611 = vadd.f32 %v599, %v448
          %v612 = vadd.f32 %v601, %v449
          %v613 = vadd.f32 %v603, %v450
          %v614 = vadd.f32 %v605, %v451
          %v615 = vadd.f32 %v607, %v452
          %v616 = vmax.f32 %v576, 1e-12
          %v617 = vmax.f32 %v577, 1e-12
          %v618 = vmax.f32 %v578, 1e-12
          %v619 = vmax.f32 %v579, 1e-12
          %v620 = vmax.f32 %v580, 1e-12
          %v621 = vmax.f32 %v581, 1e-12
          %v622 = vmax.f32 %v582, 1e-12
          %v623 = vmax.f32 %v583, 1e-12
          %v624 = vrsqrt.pop %v616
          %v625 = vmul.f32 %v624, %v616
          %v626 = vmul.f32 %v625, %v624
          %v627 = vmul.f32 0.5, %v626
          %v628 = vsub.f32 1.5, %v627
          %v629 = vmul.f32 %v624, %v628
          %v630 = vmul.f32 %v616, %v629
          %vm631 = vcmp.eq.f32.partialorder %v616, inf
          %v632 = vsel %vm631, %v616, %v630
          %vm633 = vcmp.eq.f32.partialorder %v616, 0.0
          %v634 = vand.u32 %v616, 2147483648
          %v635 = vsel %vm633, %v634, %v632
          %v636 = vrsqrt.pop %v617
          %v637 = vmul.f32 %v636, %v617
          %v638 = vmul.f32 %v637, %v636
          %v639 = vmul.f32 0.5, %v638
          %v640 = vsub.f32 1.5, %v639
          %v641 = vmul.f32 %v636, %v640
          %v642 = vmul.f32 %v617, %v641
          %vm643 = vcmp.eq.f32.partialorder %v617, inf
          %v644 = vsel %vm643, %v617, %v642
          %vm645 = vcmp.eq.f32.partialorder %v617, 0.0
          %v646 = vand.u32 %v617, 2147483648
          %v647 = vsel %vm645, %v646, %v644
          %v648 = vrsqrt.pop %v618
          %v649 = vmul.f32 %v648, %v618
          %v650 = vmul.f32 %v649, %v648
          %v651 = vmul.f32 0.5, %v650
          %v652 = vsub.f32 1.5, %v651
          %v653 = vmul.f32 %v648, %v652
          %v654 = vmul.f32 %v618, %v653
          %vm655 = vcmp.eq.f32.partialorder %v618, inf
          %v656 = vsel %vm655, %v618, %v654
          %vm657 = vcmp.eq.f32.partialorder %v618, 0.0
          %v658 = vand.u32 %v618, 2147483648
          %v659 = vsel %vm657, %v658, %v656
          %v660 = vrsqrt.pop %v619
          %v661 = vmul.f32 %v660, %v619
          %v662 = vmul.f32 %v661, %v660
          %v663 = vmul.f32 0.5, %v662
          %v664 = vsub.f32 1.5, %v663
          %v665 = vmul.f32 %v660, %v664
          %v666 = vmul.f32 %v619, %v665
          %vm667 = vcmp.eq.f32.partialorder %v619, inf
          %v668 = vsel %vm667, %v619, %v666
          %vm669 = vcmp.eq.f32.partialorder %v619, 0.0
          %v670 = vand.u32 %v619, 2147483648
          %v671 = vsel %vm669, %v670, %v668
          %v672 = vrsqrt.pop %v620
          %v673 = vmul.f32 %v672, %v620
          %v674 = vmul.f32 %v673, %v672
          %v675 = vmul.f32 0.5, %v674
          %v676 = vsub.f32 1.5, %v675
          %v677 = vmul.f32 %v672, %v676
          %v678 = vmul.f32 %v620, %v677
          %vm679 = vcmp.eq.f32.partialorder %v620, inf
          %v680 = vsel %vm679, %v620, %v678
          %vm681 = vcmp.eq.f32.partialorder %v620, 0.0
          %v682 = vand.u32 %v620, 2147483648
          %v683 = vsel %vm681, %v682, %v680
          %v684 = vrsqrt.pop %v621
          %v685 = vmul.f32 %v684, %v621
          %v686 = vmul.f32 %v685, %v684
          %v687 = vmul.f32 0.5, %v686
          %v688 = vsub.f32 1.5, %v687
          %v689 = vmul.f32 %v684, %v688
          %v690 = vmul.f32 %v621, %v689
          %vm691 = vcmp.eq.f32.partialorder %v621, inf
          %v692 = vsel %vm691, %v621, %v690
          %vm693 = vcmp.eq.f32.partialorder %v621, 0.0
          %v694 = vand.u32 %v621, 2147483648
          %v695 = vsel %vm693, %v694, %v692
          %v696 = vrsqrt.pop %v622
          %v697 = vmul.f32 %v696, %v622
          %v698 = vmul.f32 %v697, %v696
          %v699 = vmul.f32 0.5, %v698
          %v700 = vsub.f32 1.5, %v699
          %v701 = vmul.f32 %v696, %v700
          %v702 = vmul.f32 %v622, %v701
          %vm703 = vcmp.eq.f32.partialorder %v622, inf
          %v704 = vsel %vm703, %v622, %v702
          %vm705 = vcmp.eq.f32.partialorder %v622, 0.0
          %v706 = vand.u32 %v622, 2147483648
          %v707 = vsel %vm705, %v706, %v704
          %v708 = vrsqrt.pop %v623
          %v709 = vmul.f32 %v708, %v623
          %v710 = vmul.f32 %v709, %v708
          %v711 = vmul.f32 0.5, %v710
          %v712 = vsub.f32 1.5, %v711
          %v713 = vmul.f32 %v708, %v712
          %v714 = vmul.f32 %v623, %v713
          %vm715 = vcmp.eq.f32.partialorder %v623, inf
          %v716 = vsel %vm715, %v623, %v714
          %vm717 = vcmp.eq.f32.partialorder %v623, 0.0
          %v718 = vand.u32 %v623, 2147483648
          %v719 = vsel %vm717, %v718, %v716
          %v720 = vmax.f32 %v608, 1e-12
          %v721 = vmax.f32 %v609, 1e-12
          %v722 = vmax.f32 %v610, 1e-12
          %v723 = vmax.f32 %v611, 1e-12
          %v724 = vmax.f32 %v612, 1e-12
          %v725 = vmax.f32 %v613, 1e-12
          %v726 = vmax.f32 %v614, 1e-12
          %v727 = vmax.f32 %v615, 1e-12
          %v728 = vrsqrt.pop %v720
          %v729 = vmul.f32 %v728, %v720
          %v730 = vmul.f32 %v729, %v728
          %v731 = vmul.f32 0.5, %v730
          %v732 = vsub.f32 1.5, %v731
          %v733 = vmul.f32 %v728, %v732
          %v734 = vmul.f32 %v720, %v733
          %vm735 = vcmp.eq.f32.partialorder %v720, inf
          %v736 = vsel %vm735, %v720, %v734
          %vm737 = vcmp.eq.f32.partialorder %v720, 0.0
          %v738 = vand.u32 %v720, 2147483648
          %v739 = vsel %vm737, %v738, %v736
          %v740 = vrsqrt.pop %v721
          %v741 = vmul.f32 %v740, %v721
          %v742 = vmul.f32 %v741, %v740
          %v743 = vmul.f32 0.5, %v742
          %v744 = vsub.f32 1.5, %v743
          %v745 = vmul.f32 %v740, %v744
          %v746 = vmul.f32 %v721, %v745
          %vm747 = vcmp.eq.f32.partialorder %v721, inf
          %v748 = vsel %vm747, %v721, %v746
          %vm749 = vcmp.eq.f32.partialorder %v721, 0.0
          %v750 = vand.u32 %v721, 2147483648
          %v751 = vsel %vm749, %v750, %v748
          %v752 = vrsqrt.pop %v722
          %v753 = vmul.f32 %v752, %v722
          %v754 = vmul.f32 %v753, %v752
          %v755 = vmul.f32 0.5, %v754
          %v756 = vsub.f32 1.5, %v755
          %v757 = vmul.f32 %v752, %v756
          %v758 = vmul.f32 %v722, %v757
          %vm759 = vcmp.eq.f32.partialorder %v722, inf
          %v760 = vsel %vm759, %v722, %v758
          %vm761 = vcmp.eq.f32.partialorder %v722, 0.0
          %v762 = vand.u32 %v722, 2147483648
          %v763 = vsel %vm761, %v762, %v760
          %v764 = vrsqrt.pop %v723
          %v765 = vmul.f32 %v764, %v723
          %v766 = vmul.f32 %v765, %v764
          %v767 = vmul.f32 0.5, %v766
          %v768 = vsub.f32 1.5, %v767
          %v769 = vmul.f32 %v764, %v768
          %v770 = vmul.f32 %v723, %v769
          %vm771 = vcmp.eq.f32.partialorder %v723, inf
          %v772 = vsel %vm771, %v723, %v770
          %vm773 = vcmp.eq.f32.partialorder %v723, 0.0
          %v774 = vand.u32 %v723, 2147483648
          %v775 = vsel %vm773, %v774, %v772
          %v776 = vrsqrt.pop %v724
          %v777 = vmul.f32 %v776, %v724
          %v778 = vmul.f32 %v777, %v776
          %v779 = vmul.f32 0.5, %v778
          %v780 = vsub.f32 1.5, %v779
          %v781 = vmul.f32 %v776, %v780
          %v782 = vmul.f32 %v724, %v781
          %vm783 = vcmp.eq.f32.partialorder %v724, inf
          %v784 = vsel %vm783, %v724, %v782
          %vm785 = vcmp.eq.f32.partialorder %v724, 0.0
          %v786 = vand.u32 %v724, 2147483648
          %v787 = vsel %vm785, %v786, %v784
          %v788 = vrsqrt.pop %v725
          %v789 = vmul.f32 %v788, %v725
          %v790 = vmul.f32 %v789, %v788
          %v791 = vmul.f32 0.5, %v790
          %v792 = vsub.f32 1.5, %v791
          %v793 = vmul.f32 %v788, %v792
          %v794 = vmul.f32 %v725, %v793
          %vm795 = vcmp.eq.f32.partialorder %v725, inf
          %v796 = vsel %vm795, %v725, %v794
          %vm797 = vcmp.eq.f32.partialorder %v725, 0.0
          %v798 = vand.u32 %v725, 2147483648
          %v799 = vsel %vm797, %v798, %v796
          %v800 = vrsqrt.pop %v726
          %v801 = vmul.f32 %v800, %v726
          %v802 = vmul.f32 %v801, %v800
          %v803 = vmul.f32 0.5, %v802
          %v804 = vsub.f32 1.5, %v803
          %v805 = vmul.f32 %v800, %v804
          %v806 = vmul.f32 %v726, %v805
          %vm807 = vcmp.eq.f32.partialorder %v726, inf
          %v808 = vsel %vm807, %v726, %v806
          %vm809 = vcmp.eq.f32.partialorder %v726, 0.0
          %v810 = vand.u32 %v726, 2147483648
          %v811 = vsel %vm809, %v810, %v808
          %v812 = vrsqrt.pop %v727
          %v813 = vmul.f32 %v812, %v727
          %v814 = vmul.f32 %v813, %v812
          %v815 = vmul.f32 0.5, %v814
          %v816 = vsub.f32 1.5, %v815
          %v817 = vmul.f32 %v812, %v816
          %v818 = vmul.f32 %v727, %v817
          %vm819 = vcmp.eq.f32.partialorder %v727, inf
          %v820 = vsel %vm819, %v727, %v818
          %vm821 = vcmp.eq.f32.partialorder %v727, 0.0
          %v822 = vand.u32 %v727, 2147483648
          %v823 = vsel %vm821, %v822, %v820
          %v824 = vsub.f32 %v635, %v739
          %v825 = vsub.f32 %v647, %v751
          %v826 = vsub.f32 %v659, %v763
          %v827 = vsub.f32 %v671, %v775
          %v828 = vsub.f32 %v683, %v787
          %v829 = vsub.f32 %v695, %v799
          %v830 = vsub.f32 %v707, %v811
          %v831 = vsub.f32 %v719, %v823
          %v832 = vmax.f32 %v824, 0.0
          %v833 = vmax.f32 %v825, 0.0
          %v834 = vmax.f32 %v826, 0.0
          %v835 = vmax.f32 %v827, 0.0
          %v836 = vmax.f32 %v828, 0.0
          %v837 = vmax.f32 %v829, 0.0
          %v838 = vmax.f32 %v830, 0.0
          %v839 = vmax.f32 %v831, 0.0
          %v840 = vand.u32 2147483647, %v824
          %v841 = vand.u32 2147483647, %v825
          %v842 = vand.u32 2147483647, %v826
          %v843 = vand.u32 2147483647, %v827
          %v844 = vand.u32 2147483647, %v828
          %v845 = vand.u32 2147483647, %v829
          %v846 = vand.u32 2147483647, %v830
          %v847 = vand.u32 2147483647, %v831
          %v848 = vsub.f32 0.0, %v840
          %v849 = vsub.f32 0.0, %v841
          %v850 = vsub.f32 0.0, %v842
          %v851 = vsub.f32 0.0, %v843
          %v852 = vsub.f32 0.0, %v844
          %v853 = vsub.f32 0.0, %v845
          %v854 = vsub.f32 0.0, %v846
          %v855 = vsub.f32 0.0, %v847
          %v856 = vmul.f32 %v848, 1.442695
          %v857 = vpow.pop %v856
          %v858 = vmul.f32 %v849, 1.442695
          %v859 = vpow.pop %v858
          %v860 = vmul.f32 %v850, 1.442695
          %v861 = vpow.pop %v860
          %v862 = vmul.f32 %v851, 1.442695
          %v863 = vpow.pop %v862
          %v864 = vmul.f32 %v852, 1.442695
          %v865 = vpow.pop %v864
          %v866 = vmul.f32 %v853, 1.442695
          %v867 = vpow.pop %v866
          %v868 = vmul.f32 %v854, 1.442695
          %v869 = vpow.pop %v868
          %v870 = vmul.f32 %v855, 1.442695
          %v871 = vpow.pop %v870
          %v872 = vadd.f32 %v857, 1.0
          %v873 = vlog2.pop %v872
          %v874 = vmul.f32 %v873, 0.6931472
          %v875 = vmul.f32 -0.5, %v857
          %v876 = vadd.f32 %v875, 1.0
          %v877 = vmul.f32 %v876, %v857
          %v878 = vand.u32 2147483647, %v857
          %vm879 = vcmp.lt.f32.partialorder %v878, 0.0004427343
          %v880 = vsel %vm879, %v877, %v874
          %v881 = vadd.f32 %v859, 1.0
          %v882 = vlog2.pop %v881
          %v883 = vmul.f32 %v882, 0.6931472
          %v884 = vmul.f32 -0.5, %v859
          %v885 = vadd.f32 %v884, 1.0
          %v886 = vmul.f32 %v885, %v859
          %v887 = vand.u32 2147483647, %v859
          %vm888 = vcmp.lt.f32.partialorder %v887, 0.0004427343
          %v889 = vsel %vm888, %v886, %v883
          %v890 = vadd.f32 %v861, 1.0
          %v891 = vlog2.pop %v890
          %v892 = vmul.f32 %v891, 0.6931472
          %v893 = vmul.f32 -0.5, %v861
          %v894 = vadd.f32 %v893, 1.0
          %v895 = vmul.f32 %v894, %v861
          %v896 = vand.u32 2147483647, %v861
          %vm897 = vcmp.lt.f32.partialorder %v896, 0.0004427343
          %v898 = vsel %vm897, %v895, %v892
          %v899 = vadd.f32 %v863, 1.0
          %v900 = vlog2.pop %v899
          %v901 = vmul.f32 %v900, 0.6931472
          %v902 = vmul.f32 -0.5, %v863
          %v903 = vadd.f32 %v902, 1.0
          %v904 = vmul.f32 %v903, %v863
          %v905 = vand.u32 2147483647, %v863
          %vm906 = vcmp.lt.f32.partialorder %v905, 0.0004427343
          %v907 = vsel %vm906, %v904, %v901
          %v908 = vadd.f32 %v865, 1.0
          %v909 = vlog2.pop %v908
          %v910 = vmul.f32 %v909, 0.6931472
          %v911 = vmul.f32 -0.5, %v865
          %v912 = vadd.f32 %v911, 1.0
          %v913 = vmul.f32 %v912, %v865
          %v914 = vand.u32 2147483647, %v865
          %vm915 = vcmp.lt.f32.partialorder %v914, 0.0004427343
          %v916 = vsel %vm915, %v913, %v910
          %v917 = vadd.f32 %v867, 1.0
          %v918 = vlog2.pop %v917
          %v919 = vmul.f32 %v918, 0.6931472
          %v920 = vmul.f32 -0.5, %v867
          %v921 = vadd.f32 %v920, 1.0
          %v922 = vmul.f32 %v921, %v867
          %v923 = vand.u32 2147483647, %v867
          %vm924 = vcmp.lt.f32.partialorder %v923, 0.0004427343
          %v925 = vsel %vm924, %v922, %v919
          %v926 = vadd.f32 %v869, 1.0
          %v927 = vlog2.pop %v926
          %v928 = vmul.f32 %v927, 0.6931472
          %v929 = vmul.f32 -0.5, %v869
          %v930 = vadd.f32 %v929, 1.0
          %v931 = vmul.f32 %v930, %v869
          %v932 = vand.u32 2147483647, %v869
          %vm933 = vcmp.lt.f32.partialorder %v932, 0.0004427343
          %v934 = vsel %vm933, %v931, %v928
          %v935 = vadd.f32 %v871, 1.0
          %v936 = vlog2.pop %v935
          %v937 = vmul.f32 %v936, 0.6931472
          %v938 = vmul.f32 -0.5, %v871
          %v939 = vadd.f32 %v938, 1.0
          %v940 = vmul.f32 %v939, %v871
          %v941 = vand.u32 2147483647, %v871
          %vm942 = vcmp.lt.f32.partialorder %v941, 0.0004427343
          %v943 = vsel %vm942, %v940, %v937
          %v944 = vadd.f32 %v832, %v880
          %v945 = vadd.f32 %v833, %v889
          %v946 = vadd.f32 %v834, %v898
          %v947 = vadd.f32 %v835, %v907
          %v948 = vadd.f32 %v836, %v916
          %v949 = vadd.f32 %v837, %v925
          %v950 = vadd.f32 %v838, %v934
          %v951 = vadd.f32 %v839, %v943
          %v952 = vlaneseq
          %v953 = vshrl.u32 %v952, 7
          %v954 = vadd.s32 %v953, 8
          %v955 = vadd.s32 %v953, 16
          %v956 = vadd.s32 %v953, 24
          %v957 = vadd.s32 %v953, 32
          %v958 = vadd.s32 %v953, 40
          %v959 = vadd.s32 %v953, 48
          %v960 = vadd.s32 %v953, 56
          %s961 = smul.u32 %s24, 64
          %v962 = vstv %s961
          %v963 = vadd.s32 %v953, %v962
          %v964 = vadd.s32 %v954, %v962
          %v965 = vadd.s32 %v955, %v962
          %v966 = vadd.s32 %v956, %v962
          %v967 = vadd.s32 %v957, %v962
          %v968 = vadd.s32 %v958, %v962
          %v969 = vadd.s32 %v959, %v962
          %v970 = vadd.s32 %v960, %v962
          %vm971 = vcmp.lt.s32.totalorder %v963, 8
          %vm972 = vcmp.lt.s32.totalorder %v964, 8
          %vm973 = vcmp.lt.s32.totalorder %v965, 8
          %vm974 = vcmp.lt.s32.totalorder %v966, 8
          %vm975 = vcmp.lt.s32.totalorder %v967, 8
          %vm976 = vcmp.lt.s32.totalorder %v968, 8
          %vm977 = vcmp.lt.s32.totalorder %v969, 8
          %vm978 = vcmp.lt.s32.totalorder %v970, 8
          %v979 = vsel %vm971, %v944, 0.0
          %v980 = vsel %vm972, %v945, 0.0
          %v981 = vsel %vm973, %v946, 0.0
          %v982 = vsel %vm974, %v947, 0.0
          %v983 = vsel %vm975, %v948, 0.0
          %v984 = vsel %vm976, %v949, 0.0
          %v985 = vsel %vm977, %v950, 0.0
          %v986 = vsel %vm978, %v951, 0.0
          %vm987 = vcmask 7168
          %v988 = vsel %vm987, %v979, 0.0
          %v989 = vsel %vm987, %v980, 0.0
          %v990 = vadd.f32 %v988, %v989
          %v991 = vsel %vm987, %v981, 0.0
          %v992 = vadd.f32 %v990, %v991
          %v993 = vsel %vm987, %v982, 0.0
          %v994 = vadd.f32 %v992, %v993
          %v995 = vsel %vm987, %v983, 0.0
          %v996 = vadd.f32 %v994, %v995
          %v997 = vsel %vm987, %v984, 0.0
          %v998 = vadd.f32 %v996, %v997
          %v999 = vsel %vm987, %v985, 0.0
          %v1000 = vadd.f32 %v998, %v999
          %v1001 = vsel %vm987, %v986, 0.0
          %v1002 = vadd.f32 %v1000, %v1001
          %1003 = vadd.xlane.f32.xlu0 %v1002
          %v1004 = vpop.xlane.xlu0 %1003
          %v1005 = vrot.slane %v1004, 4
          %v1006 = vadd.f32 %v1004, %v1005
          %v1007 = vrot.slane %v1006, 2
          %v1008 = vadd.f32 %v1006, %v1007
          %v1009 = vrot.slane %v1008, 1
          %v1010 = vadd.f32 %v1008, %v1009
          %s1011 = vtos %v1010
          %v1012 = vstv %s1011
          %1013 = vst [vmem:[%s313] sm:$0xff] %v1012
        $region52: #{tpu_custom_call.1} parent=43 // pred_fallthru
          _
        %s1014 = sand.u32 %s188, 1
        %s1015 = scalar_lea.sflag [#allocation4], %s1014
        %s1016 = sand.u32 %s188, 1
        %s1017 = smul.addr %s1016, 8
        %s1018 = scalar_lea.vmem [#allocation3], %s1017
        // Predicated region
        $region53: #{tpu_custom_call.1} parent=43 // pred_check
          %p1019 = pneg %p198
        $region54: #{tpu_custom_call.1} parent=43 // pred_check_branch
          %1021 = sbr.rel (%p1019) target = $region56
        $region55: #{tpu_custom_call.1} parent=43 // pred_region
          %1023 = vsyncadd %s1015, 0
          %s1024 = smul.addr %s24, 8
          %s1025 = scalar_lea.hbm %s6, %s1024
          %s1027 = sshll.u32 %s1018, 4
          %s1028 = int_to_ptr.vmem [resolvable:$true] %s1027
          %s1029 = sshll.u32 %s1025, 4
          %s1030 = int_to_ptr.hbm [resolvable:$true] %s1029
          %1032 = dma.vmem_to_hbm [thread:$0]  %s1028, 128, %s1030, %s1015
        $region56: #{tpu_custom_call.1} parent=43 // pred_fallthru
          _
      $region44: #{tpu_custom_call.1} parent=5 // pred_fallthru
        _
      %p1033 = scmp.le.s32.totalorder 2, %s15
      // Predicated region
      $region57: #{tpu_custom_call.1} parent=5 // pred_check
        %p1034 = pneg %p1033
      $region58: #{tpu_custom_call.1} parent=5 // pred_check_branch
        %1036 = sbr.rel (%p1034) target = $region60
      $region59: #{tpu_custom_call.1} parent=5 // pred_region
        %s1037 = ssub.s32 %s15, 2
        // Predicated region
        $region61: #{tpu_custom_call.1} parent=59 // pred_check
          %p1038 = pneg %p204
        $region62: #{tpu_custom_call.1} parent=59 // pred_check_branch
          %1040 = sbr.rel (%p1038) target = $region64
        $region63: #{tpu_custom_call.1} parent=59 // pred_region
          %s1041 = sand.u32 %s189, 1
          %s1042 = scalar_lea.sflag [#allocation4], %s1041
          %s1043 = sand.u32 %s189, 1
          %s1044 = smul.addr %s1043, 8
          %s1045 = scalar_lea.vmem [#allocation3], %s1044
          %1047 = dma.done %s1042, 128
        $region64: #{tpu_custom_call.1} parent=59 // pred_fallthru
          _
      $region60: #{tpu_custom_call.1} parent=5 // pred_fallthru
        _
    $region6: #{tpu_custom_call.1} parent=1 // loop_footer
      %s19 = sadd.s32 1, %s15
    $region7: #{tpu_custom_call.1} parent=1 // loop_footer_branch
      %14 = sbr.rel target = $region3
    $region8: #{tpu_custom_call.1} parent=1 // loop_exit
      _
    %1048 = vsyncpa [#allocation4], 1
    %s1049 = scalar_lea.sflag [#allocation4], 1
    %1050 = vsyncpa %s1049, 1

</llo_original>
